<compile_context>
chip_gen: v7x
topology: tpu7x:2x2x1
jax: 0.10.0
libtpu: 0.0.40
codegen_flags: <defaults>
</compile_context>

<pallas_src>
import functools
import math

import jax
import jax.numpy as jnp
from jax import lax
from jax.experimental import pallas as pl
from jax.experimental.pallas import tpu as pltpu


# ----------------------------------------------------------------------------
# helpers
# ----------------------------------------------------------------------------
def _round_up(x: int, m: int) -> int:
    return ((x + m - 1) // m) * m


def _pick_tile(total: int, cap: int) -> int:
    """Largest multiple of 128 that divides `total` and is <= cap."""
    best, t = 128, 128
    while t <= min(total, cap):
        if total % t == 0:
            best = t
        t += 128
    return best


def _device_kind() -> str:
    try:
        return jax.devices()[0].device_kind.lower()
    except Exception:
        return ""


def _dropout_keep_mask(rows_i32, cols_i32, seed_i32, p_drop: float):
    """Stateless keep mask: murmur3-style hash of (row, col, seed); P(keep)=1-p."""
    r = rows_i32.astype(jnp.uint32)
    c = cols_i32.astype(jnp.uint32)
    s = seed_i32.astype(jnp.uint32) * jnp.uint32(0x9E3779B9)   # seed mixing
    x = r * jnp.uint32(0x85EBCA6B) + c * jnp.uint32(0xC2B2AE35) + s
    x = x ^ lax.shift_right_logical(x, jnp.uint32(16))
    x = x * jnp.uint32(0x7FEB352D)
    x = x ^ lax.shift_right_logical(x, jnp.uint32(15))
    x = x * jnp.uint32(0x846CA68B)
    x = x ^ lax.shift_right_logical(x, jnp.uint32(16))
    thr = jnp.uint32(min(int(round(p_drop * 4294967296.0)), 4294967295))
    return x >= thr


# ----------------------------------------------------------------------------
# Stage 1: H = dropout(X) @ W + b        (row tiles x K tiles over in_dim)
# ----------------------------------------------------------------------------
def _feat_kernel(seed_ref, x_ref, w_ref, b_ref, h_ref, acc_ref, *,
                 p_drop: float, tm: int, tk: int):
    i = pl.program_id(0)
    k = pl.program_id(1)

    @pl.when(k == 0)
    def _():
        acc_ref[...] = jnp.zeros_like(acc_ref)

    x = x_ref[...]                                       # native dtype, no up-cast
    if p_drop > 0.0:
        rows = i * tm + lax.broadcasted_iota(jnp.int32, x.shape, 0)
        cols = k * tk + lax.broadcasted_iota(jnp.int32, x.shape, 1)
        keep = _dropout_keep_mask(rows, cols, seed_ref[0], p_drop)
        scale = jnp.asarray(1.0 / (1.0 - p_drop), dtype=x.dtype)
        x = jnp.where(keep, x * scale, jnp.zeros_like(x))

    acc_ref[...] += jnp.dot(x, w_ref[...], preferred_element_type=jnp.float32)

    @pl.when(k == pl.num_programs(1) - 1)
    def _():
        h = acc_ref[...] + b_ref[...].astype(jnp.float32)   # (1, OUT) broadcasts
        h_ref[...] = h.astype(h_ref.dtype)


# ----------------------------------------------------------------------------
# Stage 2: out = activation(PPMI @ H)    (row tiles x K-reduction)
# ----------------------------------------------------------------------------
def _prop_kernel(ppmi_ref, h_ref, o_ref, *scratch,
                 apply_activation: bool, h_resident: bool, tk: int):
    k = pl.program_id(1)
    acc_ref = scratch[0] if scratch else o_ref           # f32 output: accumulate in place

    @pl.when(k == 0)
    def _():
        acc_ref[...] = jnp.zeros_like(acc_ref)

    if h_resident:
        h = h_ref[pl.ds(pl.multiple_of(k * tk, 128), tk), :]
    else:
        h = h_ref[...]

    acc_ref[...] += jnp.dot(ppmi_ref[...], h, preferred_element_type=jnp.float32)

    @pl.when(k == pl.num_programs(1) - 1)
    def _():
        v = acc_ref[...]
        if apply_activation:
            v = jnp.maximum(v, 0.0)
        o_ref[...] = v.astype(o_ref.dtype)


# ----------------------------------------------------------------------------
# Fused single-call path (small graphs: everything resident in VMEM)
# ----------------------------------------------------------------------------
def _fused_kernel(seed_ref, x_ref, w_ref, b_ref, ppmi_ref, o_ref, *,
                  p_drop: float, apply_activation: bool, prop_dt):
    x = x_ref[...]
    if p_drop > 0.0:
        rows = lax.broadcasted_iota(jnp.int32, x.shape, 0)
        cols = lax.broadcasted_iota(jnp.int32, x.shape, 1)
        keep = _dropout_keep_mask(rows, cols, seed_ref[0], p_drop)
        scale = jnp.asarray(1.0 / (1.0 - p_drop), dtype=x.dtype)
        x = jnp.where(keep, x * scale, jnp.zeros_like(x))

    h = jnp.dot(x, w_ref[...], preferred_element_type=jnp.float32)
    h = h + b_ref[...].astype(jnp.float32)
    h = h.astype(prop_dt)
    out = jnp.dot(ppmi_ref[...], h, preferred_element_type=jnp.float32)
    if apply_activation:
        out = jnp.maximum(out, 0.0)
    o_ref[...] = out.astype(o_ref.dtype)


# ----------------------------------------------------------------------------
# Wrapper
# ----------------------------------------------------------------------------
def global_gcn_layer(X, PPMI, W, b, *, seed=0, p_drop=0.0,
                     apply_activation=True, use_bf16=True, fuse=None):
    """activation(PPMI @ (dropout(X) @ W + b)).

    use_bf16 (default True): stream PPMI / H through the MXU in bf16 with f32
      accumulation -- halves the dominant HBM traffic (~0.4% relative rounding
      on the pre-aggregation features, f32 accumulate is kept).
    fuse: None -> auto (single fused pallas_call when everything fits VMEM).
    """
    N, in_dim = X.shape
    out_dim = W.shape[1]
    assert W.shape[0] == in_dim and PPMI.shape == (N, N) and b.shape == (out_dim,)
    assert 0.0 <= float(p_drop) < 1.0, "p_drop must be in [0, 1)"

    kind = _device_kind()
    is_v7 = "v7" in kind
    tile_cap = 1024 if is_v7 else 512            # v7x: bigger stage-2 tiles (3.2 TB/s HBM)
    vmem_cap = (48 << 20) if is_v7 else (96 << 20)

    LANE = 128
    n_pad = _round_up(N, LANE)
    in_pad = _round_up(in_dim, LANE)
    out_pad = _round_up(out_dim, LANE)

    x_dt = X.dtype
    out_dt = x_dt
    prop_dt = jnp.bfloat16 if use_bf16 else x_dt
    xb = jnp.dtype(x_dt).itemsize
    wb = jnp.dtype(W.dtype).itemsize
    pb = jnp.dtype(prop_dt).itemsize
    ob = jnp.dtype(out_dt).itemsize

    def _prep(a, rows, cols, dtype=None):
        # Skip no-op pads; fold any dtype cast into the single unavoidable copy.
        if dtype is not None and a.dtype != dtype:
            a = a.astype(dtype)
        pr, pc = rows - a.shape[0], cols - a.shape[1]
        if pr or pc:
            a = jnp.pad(a, ((0, pr), (0, pc)))
        return a

    # Zero-padding is exact: padded PPMI columns are 0, so bias leaking into the
    # padded rows of H never reaches valid output rows; padded X cols / W rows are 0.
    Xp = _prep(X, n_pad, in_pad)
    Wp = _prep(W, in_pad, out_pad)
    bp = _prep(b.reshape(1, out_dim), 1, out_pad)
    Pp = _prep(PPMI, n_pad, n_pad, dtype=prop_dt)
    seed_arr = jnp.asarray([seed], dtype=jnp.int32)

    # ---------------- fused path (small graphs) ----------------
    resident_bytes = 2 * (n_pad * in_pad * xb + in_pad * out_pad * wb
                          + out_pad * 4 + n_pad * n_pad * pb
                          + n_pad * out_pad * ob)
    if fuse is None:
        fuse = resident_bytes <= (8 << 20)

    if fuse:
        f_fp = resident_bytes + n_pad * out_pad * 4 + n_pad * in_pad * xb
        f_vmem = int(min(vmem_cap, max(f_fp + f_fp // 2, 16 << 20)))
        out = pl.pallas_call(
            functools.partial(_fused_kernel, p_drop=float(p_drop),
                              apply_activation=bool(apply_activation),
                              prop_dt=prop_dt),
            out_shape=jax.ShapeDtypeStruct((n_pad, out_pad), out_dt),
            grid_spec=pltpu.PrefetchScalarGridSpec(
                num_scalar_prefetch=1,                       # seed -> SMEM
                grid=(1,),
                in_specs=[
                    pl.BlockSpec((n_pad, in_pad), lambda i, s: (0, 0)),
                    pl.BlockSpec((in_pad, out_pad), lambda i, s: (0, 0)),
                    pl.BlockSpec((1, out_pad), lambda i, s: (0, 0)),
                    pl.BlockSpec((n_pad, n_pad), lambda i, s: (0, 0)),
                ],
                out_specs=pl.BlockSpec((n_pad, out_pad), lambda i, s: (0, 0)),
            ),
            compiler_params=pltpu.CompilerParams(
                dimension_semantics=("arbitrary",),
                vmem_limit_bytes=f_vmem),
            cost_estimate=pl.CostEstimate(
                flops=2 * n_pad * in_pad * out_pad + 2 * n_pad * n_pad * out_pad,
                transcendentals=0,
                bytes_accessed=n_pad * in_pad * xb + in_pad * out_pad * wb
                               + n_pad * n_pad * pb + n_pad * out_pad * ob),
        )(seed_arr, Xp, Wp, bp, Pp)
        return out[:N, :out_dim]

    # ---------------- stage 1: H = dropout(X) @ W + b ----------------
    tm = _pick_tile(n_pad, tile_cap)       # PPMI row tile (shared by both stages)
    tk = tm                                # PPMI K tile
    tk_in = _pick_tile(in_pad, 1024)       # K-tile stage 1 so wide in_dim fits v7x VMEM

    grid1 = (n_pad // tm, in_pad // tk_in)
    s1_fp = (2 * tm * tk_in * xb + 2 * tk_in * out_pad * wb + 2 * out_pad * 4
             + 2 * tm * out_pad * pb + tm * out_pad * 4)
    s1_vmem = int(min(vmem_cap, max(s1_fp + s1_fp // 4, 16 << 20)))

    H = pl.pallas_call(
        functools.partial(_feat_kernel, p_drop=float(p_drop), tm=tm, tk=tk_in),
        out_shape=jax.ShapeDtypeStruct((n_pad, out_pad), prop_dt),
        grid_spec=pltpu.PrefetchScalarGridSpec(
            num_scalar_prefetch=1,                             # seed -> SMEM
            grid=grid1,
            in_specs=[
                pl.BlockSpec((tm, tk_in), lambda i, k, s: (i, k)),      # X tile
                pl.BlockSpec((tk_in, out_pad), lambda i, k, s: (k, 0)),  # W K-tile
                pl.BlockSpec((1, out_pad), lambda i, k, s: (0, 0)),      # b (resident)
            ],
            out_specs=pl.BlockSpec((tm, out_pad), lambda i, k, s: (i, 0)),
            scratch_shapes=[pltpu.VMEM((tm, out_pad), jnp.float32)],
        ),
        compiler_params=pltpu.CompilerParams(
            dimension_semantics=("parallel", "arbitrary"),
            vmem_limit_bytes=s1_vmem),
        cost_estimate=pl.CostEstimate(
            flops=2 * n_pad * in_pad * out_pad,
            transcendentals=0,
            bytes_accessed=n_pad * in_pad * xb + in_pad * out_pad * wb
                           + n_pad * out_pad * pb),
    )(seed_arr, Xp, Wp, bp)

    # ---------------- stage 2: out = act(PPMI @ H) ----------------
    h_bytes = n_pad * out_pad * pb
    h_resident = (2 * h_bytes) <= (16 << 20)          # keep H in VMEM, DMA once
    direct_acc = jnp.dtype(out_dt) == jnp.dtype(jnp.float32)

    grid2 = (n_pad // tm, n_pad // tk)
    nbuf_p = 3 if is_v7 else 2
    s2_fp = (nbuf_p * tm * tk * pb
             + (2 * h_bytes if h_resident else 2 * tk * out_pad * pb)
             + 2 * tm * out_pad * ob
             + (0 if direct_acc else tm * out_pad * 4))
    s2_vmem = int(min(vmem_cap, max(s2_fp + s2_fp // 4, 16 << 20)))

    ppmi_kwargs = {"pipeline_mode": pl.Buffered(3)} if is_v7 else {}
    ppmi_spec = pl.BlockSpec((tm, tk), lambda i, k: (i, k), **ppmi_kwargs)
    if h_resident:
        h_spec = pl.BlockSpec((n_pad, out_pad), lambda i, k: (0, 0))   # constant -> DMA once
    else:
        h_spec = pl.BlockSpec((tk, out_pad), lambda i, k: (k, 0))

    out = pl.pallas_call(
        functools.partial(_prop_kernel,
                          apply_activation=bool(apply_activation),
                          h_resident=h_resident, tk=tk),
        out_shape=jax.ShapeDtypeStruct((n_pad, out_pad), out_dt),
        grid_spec=pltpu.PrefetchScalarGridSpec(
            num_scalar_prefetch=0,
            grid=grid2,
            in_specs=[ppmi_spec, h_spec],
            out_specs=pl.BlockSpec((tm, out_pad), lambda i, k: (i, 0)),
            scratch_shapes=([] if direct_acc
                            else [pltpu.VMEM((tm, out_pad), jnp.float32)]),
        ),
        compiler_params=pltpu.CompilerParams(
            dimension_semantics=("parallel", "arbitrary"),
            vmem_limit_bytes=s2_vmem),
        cost_estimate=pl.CostEstimate(
            flops=2 * n_pad * n_pad * out_pad,
            transcendentals=0,
            bytes_accessed=n_pad * n_pad * pb + n_pad * out_pad * pb
                           + n_pad * out_pad * ob),
    )(Pp, H)

    return out[:N, :out_dim]


# TODO(synk): the PyTorch module accepts an arbitrary `activation` callable and an
# unused graph handle `g`; only ReLU / identity is implemented in-kernel, and the
# dropout RNG stream is a deterministic hash PRNG (same Bernoulli(1-p)+scale law,
# different bit stream than torch's).


if __name__ == "__main__":
    key = jax.random.PRNGKey(0)

    def make_problem(k, N, in_dim, out_dim, dtype=jnp.float32):
        kx, kp, kw, kb = jax.random.split(k, 4)
        X = jax.random.normal(kx, (N, in_dim), dtype=jnp.float32)
        A = jax.random.uniform(kp, (N, N), dtype=jnp.float32)
        A = 0.5 * (A + A.T)
        PPMI = A / jnp.sum(A, axis=1, keepdims=True)
        stdv = 1.0 / math.sqrt(out_dim)     # reset_parameters(): uniform(-stdv, stdv)
        W = jax.random.uniform(kw, (in_dim, out_dim), jnp.float32,
                               minval=-stdv, maxval=stdv)
        b = jax.random.uniform(kb, (out_dim,), jnp.float32,
                               minval=-stdv, maxval=stdv)
        return (X.astype(dtype), PPMI.astype(dtype), W.astype(dtype), b.astype(dtype))

    def ref_forward(X, PPMI, W, b):
        Xf, Pf, Wf, bf = (a.astype(jnp.float32) for a in (X, PPMI, W, b))
        return jnp.maximum(Pf @ (Xf @ Wf + bf[None, :]), 0.0)

    k1, k2 = jax.random.split(key)

    # 1) Small graph -> fused single-call path, f32 end-to-end.
    X, PPMI, W, b = make_problem(k1, 16, 32, 32)
    ref = ref_forward(X, PPMI, W, b)
    out = jax.block_until_ready(
        global_gcn_layer(X, PPMI, W, b, p_drop=0.0, use_bf16=False))
    assert out.shape == (16, 32)
    assert jnp.allclose(out, ref, rtol=2e-2, atol=1e-2), "fused f32 mismatch"

    # 2) Small graph, default bf16 propagation operands (f32 accumulate).
    out_bf = jax.block_until_ready(global_gcn_layer(X, PPMI, W, b, p_drop=0.0))
    assert jnp.allclose(out_bf, ref, rtol=1e-1, atol=5e-2), "fused bf16 mismatch"

    # 3) Larger graph, forced two-stage tiled path (N pads 640->640, dims pad to 128).
    Xl, Pl, Wl, bl = make_problem(k2, 640, 96, 48)
    refl = ref_forward(Xl, Pl, Wl, bl)
    outl = jax.block_until_ready(
        global_gcn_layer(Xl, Pl, Wl, bl, p_drop=0.0, use_bf16=False, fuse=False))
    assert outl.shape == (640, 48)
    assert jnp.allclose(outl, refl, rtol=2e-2, atol=1e-2), "tiled f32 mismatch"

    # 4) Two-stage, default bf16 PPMI/H stream.
    outl_bf = jax.block_until_ready(
        global_gcn_layer(Xl, Pl, Wl, bl, p_drop=0.0, fuse=False))
    assert jnp.allclose(outl_bf, refl, rtol=1e-1, atol=5e-2), "tiled bf16 mismatch"

    # 5) bf16 inputs/outputs (exercises the f32 scratch-accumulator epilogue path).
    Xb, Pb, Wb, bb = (a.astype(jnp.bfloat16) for a in (Xl, Pl, Wl, bl))
    outb = jax.block_until_ready(
        global_gcn_layer(Xb, Pb, Wb, bb, p_drop=0.0, fuse=False))
    assert outb.dtype == jnp.bfloat16 and outb.shape == (640, 48)
    assert jnp.allclose(outb.astype(jnp.float32), refl, rtol=2e-1, atol=5e-2)

    # 6) Dropout (train mode): finite, deterministic per seed, and non-trivial.
    d1 = jax.block_until_ready(
        global_gcn_layer(Xl, Pl, Wl, bl, seed=123, p_drop=0.3, fuse=False))
    d2 = jax.block_until_ready(
        global_gcn_layer(Xl, Pl, Wl, bl, seed=123, p_drop=0.3, fuse=False))
    assert bool(jnp.all(jnp.isfinite(d1)))
    assert jnp.array_equal(d1, d2), "dropout not deterministic for a fixed seed"
    assert not jnp.allclose(d1, outl_bf, rtol=0.0, atol=1e-4), "dropout had no effect"

    # 7) Dropout through the fused path.
    df = jax.block_until_ready(
        global_gcn_layer(X, PPMI, W, b, seed=7, p_drop=0.5))
    assert df.shape == (16, 32) and bool(jnp.all(jnp.isfinite(df)))

    print("KERNEL_OK")
</pallas_src>

<mosaic_0001>
module attributes {stable_mosaic.version = 11 : i64} {
  func.func @_fused_kernel(%arg0: i32, %arg1: memref<1xi32, #tpu.memory_space<smem>>, %arg2: memref<128x128xf32, #tpu.memory_space<vmem>>, %arg3: memref<128x128xf32, #tpu.memory_space<vmem>>, %arg4: memref<1x128xf32, #tpu.memory_space<vmem>>, %arg5: memref<128x128xf32, #tpu.memory_space<vmem>>, %arg6: memref<128x128xf32, #tpu.memory_space<vmem>>) attributes {dimension_semantics = [#tpu.dimension_semantics<arbitrary>], iteration_bounds = array<i64: 1>, scalar_prefetch = 1 : i64, scratch_operands = 0 : i64, tpu.core_type = #tpu.core_type<tc>, window_params = [{pipeline_mode = #tpu.pipeline_mode<synchronous>, transform_indices = @transform_0, window_bounds = array<i64: 128, 128>}, {pipeline_mode = #tpu.pipeline_mode<synchronous>, transform_indices = @transform_1, window_bounds = array<i64: 128, 128>}, {pipeline_mode = #tpu.pipeline_mode<synchronous>, transform_indices = @transform_2, window_bounds = array<i64: 1, 128>}, {pipeline_mode = #tpu.pipeline_mode<synchronous>, transform_indices = @transform_3, window_bounds = array<i64: 128, 128>}, {pipeline_mode = #tpu.pipeline_mode<synchronous>, transform_indices = @transform_4, window_bounds = array<i64: 128, 128>}]} {
    %c0 = arith.constant 0 : index
    %c0_0 = arith.constant 0 : index
    %0 = vector.load %arg2[%c0, %c0_0] : memref<128x128xf32, #tpu.memory_space<vmem>>, vector<128x128xf32>
    %c0_1 = arith.constant 0 : index
    %c0_2 = arith.constant 0 : index
    %1 = vector.load %arg3[%c0_1, %c0_2] : memref<128x128xf32, #tpu.memory_space<vmem>>, vector<128x128xf32>
    %cst = arith.constant dense<0.000000e+00> : vector<128x128xf32>
    %2 = tpu.matmul %0, %1, %cst {dimension_numbers = #tpu.dot_dimension_numbers<[1], [0], [0], [1], [0, 0, 1, 1], [], []>} : vector<128x128xf32>, vector<128x128xf32>, vector<128x128xf32> -> vector<128x128xf32>
    %c0_3 = arith.constant 0 : index
    %c0_4 = arith.constant 0 : index
    %3 = vector.load %arg4[%c0_3, %c0_4] : memref<1x128xf32, #tpu.memory_space<vmem>>, vector<1x128xf32>
    %4 = vector.broadcast %3 : vector<1x128xf32> to vector<128x128xf32>
    %5 = arith.addf %2, %4 : vector<128x128xf32>
    %c0_5 = arith.constant 0 : index
    %c0_6 = arith.constant 0 : index
    %6 = vector.load %arg5[%c0_5, %c0_6] : memref<128x128xf32, #tpu.memory_space<vmem>>, vector<128x128xf32>
    %cst_7 = arith.constant dense<0.000000e+00> : vector<128x128xf32>
    %7 = tpu.matmul %6, %5, %cst_7 {dimension_numbers = #tpu.dot_dimension_numbers<[1], [0], [0], [1], [0, 0, 1, 1], [], []>} : vector<128x128xf32>, vector<128x128xf32>, vector<128x128xf32> -> vector<128x128xf32>
    %cst_8 = arith.constant 0.000000e+00 : f32
    %8 = vector.broadcast %cst_8 : f32 to vector<128x128xf32>
    %9 = arith.maximumf %7, %8 : vector<128x128xf32>
    %c0_9 = arith.constant 0 : index
    %c0_10 = arith.constant 0 : index
    %10 = vector.load %arg6[%c0_9, %c0_10] : memref<128x128xf32, #tpu.memory_space<vmem>>, vector<128x128xf32>
    tpu.vector_store %arg6[%c0_9, %c0_10], %9 {strides = array<i32>} : memref<128x128xf32, #tpu.memory_space<vmem>>, vector<128x128xf32>,
    return
  }
  func.func @transform_0(%arg0: i32, %arg1: memref<1xi32, #tpu.memory_space<smem>>) -> (i32, i32) {
    %c0_i32 = arith.constant 0 : i32
    %c0_i32_0 = arith.constant 0 : i32
    %c0_i32_1 = arith.constant 0 : i32
    return %c0_i32, %c0_i32_0 : i32, i32
  }
  func.func @transform_1(%arg0: i32, %arg1: memref<1xi32, #tpu.memory_space<smem>>) -> (i32, i32) {
    %c0_i32 = arith.constant 0 : i32
    %c0_i32_0 = arith.constant 0 : i32
    %c0_i32_1 = arith.constant 0 : i32
    return %c0_i32, %c0_i32_0 : i32, i32
  }
  func.func @transform_2(%arg0: i32, %arg1: memref<1xi32, #tpu.memory_space<smem>>) -> (i32, i32) {
    %c0_i32 = arith.constant 0 : i32
    %c0_i32_0 = arith.constant 0 : i32
    %c0_i32_1 = arith.constant 0 : i32
    return %c0_i32, %c0_i32_0 : i32, i32
  }
  func.func @transform_3(%arg0: i32, %arg1: memref<1xi32, #tpu.memory_space<smem>>) -> (i32, i32) {
    %c0_i32 = arith.constant 0 : i32
    %c0_i32_0 = arith.constant 0 : i32
    %c0_i32_1 = arith.constant 0 : i32
    return %c0_i32, %c0_i32_0 : i32, i32
  }
  func.func @transform_4(%arg0: i32, %arg1: memref<1xi32, #tpu.memory_space<smem>>) -> (i32, i32) {
    %c0_i32 = arith.constant 0 : i32
    %c0_i32_0 = arith.constant 0 : i32
    %c0_i32_1 = arith.constant 0 : i32
    return %c0_i32, %c0_i32_0 : i32, i32
  }
}

</mosaic_0001>

<llo_original>
// kernel: tpu_custom_call.1
$region0: #{tpu_custom_call.1}
  #allocation0 [shape = 'u32[]', space=smem, size = 0x4, offset = 0x4, fixed_abs, tag = 'smem constant byte address 0x4 - core index']
  #allocation1 [shape = 'u32[144,128]{1,0:T(1,128)}', space=vmem, size = 0x12000, scoped, tag = 'internal scratch']
  #allocation2 [shape = 's32[1]{0}', space=sflag, size = 0x4, scoped, tag = 'scoped memory for tpu_custom_call.1']
  #allocation3 [shape = 's32[1]{0:T(128)S(6)}', space=smem, size = 0x200, scoped, tag = 'prefetched SMEM operand 0']
  %s0 = inlined_call_operand.<no memory space> [shape: s32[1], index: 0, kind: input, shape index: {}]
  %s1 = inlined_call_operand.hbm [shape: f32[128,128], index: 1, kind: input, shape index: {}]
  %s2 = inlined_call_operand.hbm [shape: f32[128,128], index: 2, kind: input, shape index: {}]
  %s3 = inlined_call_operand.vmem [shape: f32[1,128], index: 3, kind: input, shape index: {}]
  %s4 = inlined_call_operand.hbm [shape: f32[128,128], index: 4, kind: input, shape index: {}]
  %s5 = inlined_call_operand.hbm [shape: f32[128,128], index: 5, kind: output, shape index: {}]
  %s6 = sld [smem:[#allocation0]]
  $region38: #{tpu_custom_call.1} parent=0
    _
  %s8 = ssub.s32 1, %s6
  %s9 = scalar_select 0, %s8, %s6
  %10 = sst [smem:[#allocation3]] %s0
  $region1: #{tpu_custom_call.1} parent=0
    #allocation4 [shape = 'u8[65536]{0}', space=vmem, size = 0x10000, scoped, tag = 'input window, operand 1, single buffered']
    #allocation5 [shape = 's32[1]{0}', space=sflag, size = 0x4, scoped, tag = 'scoped memory for tpu_custom_call.1']
    #allocation6 [shape = 's32[1]{0}', space=sflag, size = 0x4, scoped, tag = 'scoped memory for tpu_custom_call.1']
    #allocation7 [shape = 'u8[65536]{0}', space=vmem, size = 0x10000, scoped, tag = 'input window, operand 2, single buffered']
    #allocation8 [shape = 's32[1]{0}', space=sflag, size = 0x4, scoped, tag = 'scoped memory for tpu_custom_call.1']
    #allocation9 [shape = 'u8[65536]{0}', space=vmem, size = 0x10000, scoped, tag = 'input window, operand 4, single buffered']
    #allocation10 [shape = 'u8[65536]{0}', space=vmem, size = 0x10000, scoped, tag = 'output window, operand 0, single buffered']
    %11 = vsyncpa [#allocation5], 0
    %12 = vsyncpa [#allocation8], 0
    %13 = vsyncpa [#allocation6], 0
    // Predicated region
    $region2: #{tpu_custom_call.1} parent=1 // pred_check
      _
    $region3: #{tpu_custom_call.1} parent=1 // pred_check_branch
      %15 = sbr.rel (0) target = $region5
    $region4: #{tpu_custom_call.1} parent=1 // pred_region
      %s17 = ssub.s32 2048, 2048
      %18 = vsyncadd [#allocation5], %s17
      %s19 = sshll.u32 [#allocation4], 4
      %s20 = int_to_ptr.vmem [resolvable:$true] %s19
      %25 = dma.hbm_to_vmem [thread:$0]  %s1, 2048, %s20, [#allocation5], 128, 128, 8
    $region5: #{tpu_custom_call.1} parent=1 // pred_fallthru
      _
    // Predicated region
    $region6: #{tpu_custom_call.1} parent=1 // pred_check
      _
    $region7: #{tpu_custom_call.1} parent=1 // pred_check_branch
      %27 = sbr.rel (0) target = $region9
    $region8: #{tpu_custom_call.1} parent=1 // pred_region
      %s29 = ssub.s32 2048, 2048
      %30 = vsyncadd [#allocation8], %s29
      %s31 = sshll.u32 [#allocation7], 4
      %s32 = int_to_ptr.vmem [resolvable:$true] %s31
      %37 = dma.hbm_to_vmem [thread:$0]  %s2, 2048, %s32, [#allocation8], 128, 128, 8
    $region9: #{tpu_custom_call.1} parent=1 // pred_fallthru
      _
    // Predicated region
    $region10: #{tpu_custom_call.1} parent=1 // pred_check
      _
    $region11: #{tpu_custom_call.1} parent=1 // pred_check_branch
      %39 = sbr.rel (0) target = $region13
    $region12: #{tpu_custom_call.1} parent=1 // pred_region
      _
    $region13: #{tpu_custom_call.1} parent=1 // pred_fallthru
      _
    // Predicated region
    $region14: #{tpu_custom_call.1} parent=1 // pred_check
      _
    $region15: #{tpu_custom_call.1} parent=1 // pred_check_branch
      %41 = sbr.rel (0) target = $region17
    $region16: #{tpu_custom_call.1} parent=1 // pred_region
      %s43 = ssub.s32 2048, 2048
      %44 = vsyncadd [#allocation8], %s43
      %s45 = sshll.u32 [#allocation9], 4
      %s46 = int_to_ptr.vmem [resolvable:$true] %s45
      %51 = dma.hbm_to_vmem [thread:$0]  %s4, 2048, %s46, [#allocation8], 128, 128, 8
    $region17: #{tpu_custom_call.1} parent=1 // pred_fallthru
      _
    // Predicated region
    $region18: #{tpu_custom_call.1} parent=1 // pred_check
      _
    $region19: #{tpu_custom_call.1} parent=1 // pred_check_branch
      %53 = sbr.rel (0) target = $region21
    $region20: #{tpu_custom_call.1} parent=1 // pred_region
      %54 = dma.done [#allocation5], 2048
    $region21: #{tpu_custom_call.1} parent=1 // pred_fallthru
      _
    // Predicated region
    $region22: #{tpu_custom_call.1} parent=1 // pred_check
      _
    $region23: #{tpu_custom_call.1} parent=1 // pred_check_branch
      %56 = sbr.rel (0) target = $region25
    $region24: #{tpu_custom_call.1} parent=1 // pred_region
      %57 = dma.done [#allocation8], 2048
    $region25: #{tpu_custom_call.1} parent=1 // pred_fallthru
      _
    // Predicated region
    $region26: #{tpu_custom_call.1} parent=1 // pred_check
      _
    $region27: #{tpu_custom_call.1} parent=1 // pred_check_branch
      %59 = sbr.rel (0) target = $region29
    $region28: #{tpu_custom_call.1} parent=1 // pred_region
      %60 = dma.done [#allocation8], 2048
    $region29: #{tpu_custom_call.1} parent=1 // pred_fallthru
      _
    %v61 = vld [vmem:[#allocation4] sm:$0xff]
    %v62 = vld [vmem:[#allocation4 + $0x8] sm:$0xff]
    %v63 = vld [vmem:[#allocation4 + $0x10] sm:$0xff]
    %v64 = vld [vmem:[#allocation4 + $0x18] sm:$0xff]
    %v65 = vld [vmem:[#allocation4 + $0x20] sm:$0xff]
    %v66 = vld [vmem:[#allocation4 + $0x28] sm:$0xff]
    %v67 = vld [vmem:[#allocation4 + $0x30] sm:$0xff]
    %v68 = vld [vmem:[#allocation4 + $0x38] sm:$0xff]
    %v69 = vld [vmem:[#allocation4 + $0x40] sm:$0xff]
    %v70 = vld [vmem:[#allocation4 + $0x48] sm:$0xff]
    %v71 = vld [vmem:[#allocation4 + $0x50] sm:$0xff]
    %v72 = vld [vmem:[#allocation4 + $0x58] sm:$0xff]
    %v73 = vld [vmem:[#allocation4 + $0x60] sm:$0xff]
    %v74 = vld [vmem:[#allocation4 + $0x68] sm:$0xff]
    %v75 = vld [vmem:[#allocation4 + $0x70] sm:$0xff]
    %v76 = vld [vmem:[#allocation4 + $0x78] sm:$0xff]
    %v77 = vld [vmem:[#allocation7] sm:$0xff]
    %v78 = vld [vmem:[#allocation7 + $0x8] sm:$0xff]
    %v79 = vld [vmem:[#allocation7 + $0x10] sm:$0xff]
    %v80 = vld [vmem:[#allocation7 + $0x18] sm:$0xff]
    %v81 = vld [vmem:[#allocation7 + $0x20] sm:$0xff]
    %v82 = vld [vmem:[#allocation7 + $0x28] sm:$0xff]
    %v83 = vld [vmem:[#allocation7 + $0x30] sm:$0xff]
    %v84 = vld [vmem:[#allocation7 + $0x38] sm:$0xff]
    %v85 = vld [vmem:[#allocation7 + $0x40] sm:$0xff]
    %v86 = vld [vmem:[#allocation7 + $0x48] sm:$0xff]
    %v87 = vld [vmem:[#allocation7 + $0x50] sm:$0xff]
    %v88 = vld [vmem:[#allocation7 + $0x58] sm:$0xff]
    %v89 = vld [vmem:[#allocation7 + $0x60] sm:$0xff]
    %v90 = vld [vmem:[#allocation7 + $0x68] sm:$0xff]
    %v91 = vld [vmem:[#allocation7 + $0x70] sm:$0xff]
    %v92 = vld [vmem:[#allocation7 + $0x78] sm:$0xff]
    %v93 = vld [vmem:[%s3] sm:$0x1]
    %v95 = vlaneseq
    %v96 = vshrl.u32 %v95, 7
    %v97 = vsub.s32 0, %v96
    %v98 = vrot.slane %v93, %v97
    %100 = vmatprep.subr.mxu0 0.0
    %101 = vmatpush1.msra.mxu0 %v77
    %102 = vmatprep.subr.mxu0 0.0
    %103 = vmatpush1.msra.mxu0 %v78
    %104 = vmatprep.subr.mxu0 0.0
    %105 = vmatpush1.msra.mxu0 %v79
    %106 = vmatprep.subr.mxu0 0.0
    %107 = vmatpush1.msra.mxu0 %v80
    %108 = vmatprep.subr.mxu0 0.0
    %109 = vmatpush1.msra.mxu0 %v81
    %110 = vmatprep.subr.mxu0 0.0
    %111 = vmatpush1.msra.mxu0 %v82
    %112 = vmatprep.subr.mxu0 0.0
    %113 = vmatpush1.msra.mxu0 %v83
    %114 = vmatprep.subr.mxu0 0.0
    %115 = vmatpush1.msra.mxu0 %v84
    %116 = vmatprep.subr.mxu0 0.0
    %117 = vmatpush1.msra.mxu0 %v85
    %118 = vmatprep.subr.mxu0 0.0
    %119 = vmatpush1.msra.mxu0 %v86
    %120 = vmatprep.subr.mxu0 0.0
    %121 = vmatpush1.msra.mxu0 %v87
    %122 = vmatprep.subr.mxu0 0.0
    %123 = vmatpush1.msra.mxu0 %v88
    %124 = vmatprep.subr.mxu0 0.0
    %125 = vmatpush1.msra.mxu0 %v89
    %126 = vmatprep.subr.mxu0 0.0
    %127 = vmatpush1.msra.mxu0 %v90
    %128 = vmatprep.subr.mxu0 0.0
    %129 = vmatpush1.msra.mxu0 %v91
    %130 = vmatprep.subr.mxu0 0.0
    %131 = vmatpush1.msra.mxu0 %v92
    %132 = vmatprep.subr.mxu0 0.0
    %133 = vmatpush1.msra.mxu0 0.0
    %134 = vmatprep.subr.mxu0 0.0
    %135 = vmatpush1.msra.mxu0 0.0
    %136 = vmatprep.subr.mxu0 0.0
    %137 = vmatpush1.msra.mxu0 0.0
    %138 = vmatprep.subr.mxu0 0.0
    %139 = vmatpush1.msra.mxu0 0.0
    %140 = vmatprep.subr.mxu0 0.0
    %141 = vmatpush1.msra.mxu0 0.0
    %142 = vmatprep.subr.mxu0 0.0
    %143 = vmatpush1.msra.mxu0 0.0
    %144 = vmatprep.subr.mxu0 0.0
    %145 = vmatpush1.msra.mxu0 0.0
    %146 = vmatprep.subr.mxu0 0.0
    %147 = vmatpush1.msra.mxu0 0.0
    %148 = vmatprep.subr.mxu0 0.0
    %149 = vmatpush1.msra.mxu0 0.0
    %150 = vmatprep.subr.mxu0 0.0
    %151 = vmatpush1.msra.mxu0 0.0
    %152 = vmatprep.subr.mxu0 0.0
    %153 = vmatpush1.msra.mxu0 0.0
    %154 = vmatprep.subr.mxu0 0.0
    %155 = vmatpush1.msra.mxu0 0.0
    %156 = vmatprep.subr.mxu0 0.0
    %157 = vmatpush1.msra.mxu0 0.0
    %158 = vmatprep.subr.mxu0 0.0
    %159 = vmatpush1.msra.mxu0 0.0
    %160 = vmatprep.subr.mxu0 0.0
    %161 = vmatpush1.msra.mxu0 0.0
    %162 = vmatprep.subr.mxu0 0.0
    %163 = vmatpush1.msra.mxu0 0.0
    %164 = vmatprep.mubr.f32.mxu0 0.0
    %165 = vmatmul.mubr.f32.gmra.mrb[0].mxu0 %v61
    %v166 = vpop.f32.mrb[0].mxu0
    %v167 = vadd.f32 %v98, %v166
    %v168 = vpop.f32.mrb[0].mxu0
    %169 = vmatprep.mubr.f32.mxu0 0.0
    %170 = vmatmul.mubr.f32.gmra.mrb[0].mxu0 %v62
    %v171 = vpop.f32.mrb[0].mxu0
    %v172 = vadd.f32 %v98, %v171
    %v173 = vpop.f32.mrb[0].mxu0
    %174 = vmatprep.mubr.f32.mxu0 0.0
    %175 = vmatmul.mubr.f32.gmra.mrb[0].mxu0 %v63
    %v176 = vpop.f32.mrb[0].mxu0
    %v177 = vadd.f32 %v98, %v176
    %v178 = vpop.f32.mrb[0].mxu0
    %179 = vmatprep.mubr.f32.mxu0 0.0
    %180 = vmatmul.mubr.f32.gmra.mrb[0].mxu0 %v64
    %v181 = vpop.f32.mrb[0].mxu0
    %v182 = vadd.f32 %v98, %v181
    %v183 = vpop.f32.mrb[0].mxu0
    %184 = vmatprep.mubr.f32.mxu0 0.0
    %185 = vmatmul.mubr.f32.gmra.mrb[0].mxu0 %v65
    %v186 = vpop.f32.mrb[0].mxu0
    %v187 = vadd.f32 %v98, %v186
    %v188 = vpop.f32.mrb[0].mxu0
    %189 = vmatprep.mubr.f32.mxu0 0.0
    %190 = vmatmul.mubr.f32.gmra.mrb[0].mxu0 %v66
    %v191 = vpop.f32.mrb[0].mxu0
    %v192 = vadd.f32 %v98, %v191
    %v193 = vpop.f32.mrb[0].mxu0
    %194 = vmatprep.mubr.f32.mxu0 0.0
    %195 = vmatmul.mubr.f32.gmra.mrb[0].mxu0 %v67
    %v196 = vpop.f32.mrb[0].mxu0
    %v197 = vadd.f32 %v98, %v196
    %v198 = vpop.f32.mrb[0].mxu0
    %199 = vmatprep.mubr.f32.mxu0 0.0
    %200 = vmatmul.mubr.f32.gmra.mrb[0].mxu0 %v68
    %v201 = vpop.f32.mrb[0].mxu0
    %v202 = vadd.f32 %v98, %v201
    %v203 = vpop.f32.mrb[0].mxu0
    %204 = vmatprep.mubr.f32.mxu0 0.0
    %205 = vmatmul.mubr.f32.gmra.mrb[0].mxu0 %v69
    %v206 = vpop.f32.mrb[0].mxu0
    %v207 = vadd.f32 %v98, %v206
    %v208 = vpop.f32.mrb[0].mxu0
    %209 = vmatprep.mubr.f32.mxu0 0.0
    %210 = vmatmul.mubr.f32.gmra.mrb[0].mxu0 %v70
    %v211 = vpop.f32.mrb[0].mxu0
    %v212 = vadd.f32 %v98, %v211
    %v213 = vpop.f32.mrb[0].mxu0
    %214 = vmatprep.mubr.f32.mxu0 0.0
    %215 = vmatmul.mubr.f32.gmra.mrb[0].mxu0 %v71
    %v216 = vpop.f32.mrb[0].mxu0
    %v217 = vadd.f32 %v98, %v216
    %v218 = vpop.f32.mrb[0].mxu0
    %219 = vmatprep.mubr.f32.mxu0 0.0
    %220 = vmatmul.mubr.f32.gmra.mrb[0].mxu0 %v72
    %v221 = vpop.f32.mrb[0].mxu0
    %v222 = vadd.f32 %v98, %v221
    %v223 = vpop.f32.mrb[0].mxu0
    %224 = vmatprep.mubr.f32.mxu0 0.0
    %225 = vmatmul.mubr.f32.gmra.mrb[0].mxu0 %v73
    %v226 = vpop.f32.mrb[0].mxu0
    %v227 = vadd.f32 %v98, %v226
    %v228 = vpop.f32.mrb[0].mxu0
    %229 = vmatprep.mubr.f32.mxu0 0.0
    %230 = vmatmul.mubr.f32.gmra.mrb[0].mxu0 %v74
    %v231 = vpop.f32.mrb[0].mxu0
    %v232 = vadd.f32 %v98, %v231
    %v233 = vpop.f32.mrb[0].mxu0
    %234 = vmatprep.mubr.f32.mxu0 0.0
    %235 = vmatmul.mubr.f32.gmra.mrb[0].mxu0 %v75
    %v236 = vpop.f32.mrb[0].mxu0
    %v237 = vadd.f32 %v98, %v236
    %v238 = vpop.f32.mrb[0].mxu0
    %239 = vmatprep.mubr.f32.mxu0 0.0
    %240 = vmatmul.mubr.f32.gmra.mrb[0].mxu0 %v76
    %v241 = vpop.f32.mrb[0].mxu0
    %v242 = vadd.f32 %v98, %v241
    %v243 = vpop.f32.mrb[0].mxu0
    %244 = vdwg.mxu0
    %v245 = vld [vmem:[#allocation9] sm:$0xff]
    %v246 = vld [vmem:[#allocation9 + $0x8] sm:$0xff]
    %v247 = vld [vmem:[#allocation9 + $0x10] sm:$0xff]
    %v248 = vld [vmem:[#allocation9 + $0x18] sm:$0xff]
    %v249 = vld [vmem:[#allocation9 + $0x20] sm:$0xff]
    %v250 = vld [vmem:[#allocation9 + $0x28] sm:$0xff]
    %v251 = vld [vmem:[#allocation9 + $0x30] sm:$0xff]
    %v252 = vld [vmem:[#allocation9 + $0x38] sm:$0xff]
    %v253 = vld [vmem:[#allocation9 + $0x40] sm:$0xff]
    %v254 = vld [vmem:[#allocation9 + $0x48] sm:$0xff]
    %v255 = vld [vmem:[#allocation9 + $0x50] sm:$0xff]
    %v256 = vld [vmem:[#allocation9 + $0x58] sm:$0xff]
    %v257 = vld [vmem:[#allocation9 + $0x60] sm:$0xff]
    %v258 = vld [vmem:[#allocation9 + $0x68] sm:$0xff]
    %v259 = vld [vmem:[#allocation9 + $0x70] sm:$0xff]
    %v260 = vld [vmem:[#allocation9 + $0x78] sm:$0xff]
    %261 = vmatprep.subr.mxu0 0.0
    %262 = vmatpush1.msra.mxu0 %v167
    %263 = vmatprep.subr.mxu0 0.0
    %264 = vmatpush1.msra.mxu0 %v172
    %265 = vmatprep.subr.mxu0 0.0
    %266 = vmatpush1.msra.mxu0 %v177
    %267 = vmatprep.subr.mxu0 0.0
    %268 = vmatpush1.msra.mxu0 %v182
    %269 = vmatprep.subr.mxu0 0.0
    %270 = vmatpush1.msra.mxu0 %v187
    %271 = vmatprep.subr.mxu0 0.0
    %272 = vmatpush1.msra.mxu0 %v192
    %273 = vmatprep.subr.mxu0 0.0
    %274 = vmatpush1.msra.mxu0 %v197
    %275 = vmatprep.subr.mxu0 0.0
    %276 = vmatpush1.msra.mxu0 %v202
    %277 = vmatprep.subr.mxu0 0.0
    %278 = vmatpush1.msra.mxu0 %v207
    %279 = vmatprep.subr.mxu0 0.0
    %280 = vmatpush1.msra.mxu0 %v212
    %281 = vmatprep.subr.mxu0 0.0
    %282 = vmatpush1.msra.mxu0 %v217
    %283 = vmatprep.subr.mxu0 0.0
    %284 = vmatpush1.msra.mxu0 %v222
    %285 = vmatprep.subr.mxu0 0.0
    %286 = vmatpush1.msra.mxu0 %v227
    %287 = vmatprep.subr.mxu0 0.0
    %288 = vmatpush1.msra.mxu0 %v232
    %289 = vmatprep.subr.mxu0 0.0
    %290 = vmatpush1.msra.mxu0 %v237
    %291 = vmatprep.subr.mxu0 0.0
    %292 = vmatpush1.msra.mxu0 %v242
    %293 = vmatprep.subr.mxu0 0.0
    %294 = vmatpush1.msra.mxu0 0.0
    %295 = vmatprep.subr.mxu0 0.0
    %296 = vmatpush1.msra.mxu0 0.0
    %297 = vmatprep.subr.mxu0 0.0
    %298 = vmatpush1.msra.mxu0 0.0
    %299 = vmatprep.subr.mxu0 0.0
    %300 = vmatpush1.msra.mxu0 0.0
    %301 = vmatprep.subr.mxu0 0.0
    %302 = vmatpush1.msra.mxu0 0.0
    %303 = vmatprep.subr.mxu0 0.0
    %304 = vmatpush1.msra.mxu0 0.0
    %305 = vmatprep.subr.mxu0 0.0
    %306 = vmatpush1.msra.mxu0 0.0
    %307 = vmatprep.subr.mxu0 0.0
    %308 = vmatpush1.msra.mxu0 0.0
    %309 = vmatprep.subr.mxu0 0.0
    %310 = vmatpush1.msra.mxu0 0.0
    %311 = vmatprep.subr.mxu0 0.0
    %312 = vmatpush1.msra.mxu0 0.0
    %313 = vmatprep.subr.mxu0 0.0
    %314 = vmatpush1.msra.mxu0 0.0
    %315 = vmatprep.subr.mxu0 0.0
    %316 = vmatpush1.msra.mxu0 0.0
    %317 = vmatprep.subr.mxu0 0.0
    %318 = vmatpush1.msra.mxu0 0.0
    %319 = vmatprep.subr.mxu0 0.0
    %320 = vmatpush1.msra.mxu0 0.0
    %321 = vmatprep.subr.mxu0 0.0
    %322 = vmatpush1.msra.mxu0 0.0
    %323 = vmatprep.subr.mxu0 0.0
    %324 = vmatpush1.msra.mxu0 0.0
    %325 = vmatprep.mubr.f32.mxu0 0.0
    %326 = vmatmul.mubr.f32.gmra.mrb[0].mxu0 %v245
    %v327 = vpop.f32.mrb[0].mxu0
    %v328 = vadd.f32 0.0, %v327
    %v329 = vpop.f32.mrb[0].mxu0
    %330 = vmatprep.mubr.f32.mxu0 0.0
    %331 = vmatmul.mubr.f32.gmra.mrb[0].mxu0 %v246
    %v332 = vpop.f32.mrb[0].mxu0
    %v333 = vadd.f32 0.0, %v332
    %v334 = vpop.f32.mrb[0].mxu0
    %335 = vmatprep.mubr.f32.mxu0 0.0
    %336 = vmatmul.mubr.f32.gmra.mrb[0].mxu0 %v247
    %v337 = vpop.f32.mrb[0].mxu0
    %v338 = vadd.f32 0.0, %v337
    %v339 = vpop.f32.mrb[0].mxu0
    %340 = vmatprep.mubr.f32.mxu0 0.0
    %341 = vmatmul.mubr.f32.gmra.mrb[0].mxu0 %v248
    %v342 = vpop.f32.mrb[0].mxu0
    %v343 = vadd.f32 0.0, %v342
    %v344 = vpop.f32.mrb[0].mxu0
    %345 = vmatprep.mubr.f32.mxu0 0.0
    %346 = vmatmul.mubr.f32.gmra.mrb[0].mxu0 %v249
    %v347 = vpop.f32.mrb[0].mxu0
    %v348 = vadd.f32 0.0, %v347
    %v349 = vpop.f32.mrb[0].mxu0
    %350 = vmatprep.mubr.f32.mxu0 0.0
    %351 = vmatmul.mubr.f32.gmra.mrb[0].mxu0 %v250
    %v352 = vpop.f32.mrb[0].mxu0
    %v353 = vadd.f32 0.0, %v352
    %v354 = vpop.f32.mrb[0].mxu0
    %355 = vmatprep.mubr.f32.mxu0 0.0
    %356 = vmatmul.mubr.f32.gmra.mrb[0].mxu0 %v251
    %v357 = vpop.f32.mrb[0].mxu0
    %v358 = vadd.f32 0.0, %v357
    %v359 = vpop.f32.mrb[0].mxu0
    %360 = vmatprep.mubr.f32.mxu0 0.0
    %361 = vmatmul.mubr.f32.gmra.mrb[0].mxu0 %v252
    %v362 = vpop.f32.mrb[0].mxu0
    %v363 = vadd.f32 0.0, %v362
    %v364 = vpop.f32.mrb[0].mxu0
    %365 = vmatprep.mubr.f32.mxu0 0.0
    %366 = vmatmul.mubr.f32.gmra.mrb[0].mxu0 %v253
    %v367 = vpop.f32.mrb[0].mxu0
    %v368 = vadd.f32 0.0, %v367
    %v369 = vpop.f32.mrb[0].mxu0
    %370 = vmatprep.mubr.f32.mxu0 0.0
    %371 = vmatmul.mubr.f32.gmra.mrb[0].mxu0 %v254
    %v372 = vpop.f32.mrb[0].mxu0
    %v373 = vadd.f32 0.0, %v372
    %v374 = vpop.f32.mrb[0].mxu0
    %375 = vmatprep.mubr.f32.mxu0 0.0
    %376 = vmatmul.mubr.f32.gmra.mrb[0].mxu0 %v255
    %v377 = vpop.f32.mrb[0].mxu0
    %v378 = vadd.f32 0.0, %v377
    %v379 = vpop.f32.mrb[0].mxu0
    %380 = vmatprep.mubr.f32.mxu0 0.0
    %381 = vmatmul.mubr.f32.gmra.mrb[0].mxu0 %v256
    %v382 = vpop.f32.mrb[0].mxu0
    %v383 = vadd.f32 0.0, %v382
    %v384 = vpop.f32.mrb[0].mxu0
    %385 = vmatprep.mubr.f32.mxu0 0.0
    %386 = vmatmul.mubr.f32.gmra.mrb[0].mxu0 %v257
    %v387 = vpop.f32.mrb[0].mxu0
    %v388 = vadd.f32 0.0, %v387
    %v389 = vpop.f32.mrb[0].mxu0
    %390 = vmatprep.mubr.f32.mxu0 0.0
    %391 = vmatmul.mubr.f32.gmra.mrb[0].mxu0 %v258
    %v392 = vpop.f32.mrb[0].mxu0
    %v393 = vadd.f32 0.0, %v392
    %v394 = vpop.f32.mrb[0].mxu0
    %395 = vmatprep.mubr.f32.mxu0 0.0
    %396 = vmatmul.mubr.f32.gmra.mrb[0].mxu0 %v259
    %v397 = vpop.f32.mrb[0].mxu0
    %v398 = vadd.f32 0.0, %v397
    %v399 = vpop.f32.mrb[0].mxu0
    %400 = vmatprep.mubr.f32.mxu0 0.0
    %401 = vmatmul.mubr.f32.gmra.mrb[0].mxu0 %v260
    %v402 = vpop.f32.mrb[0].mxu0
    %v403 = vadd.f32 0.0, %v402
    %v404 = vpop.f32.mrb[0].mxu0
    %405 = vdwg.mxu0
    %v406 = vmax.f32 %v328, 0.0
    %v407 = vmax.f32 %v333, 0.0
    %v408 = vmax.f32 %v338, 0.0
    %v409 = vmax.f32 %v343, 0.0
    %v410 = vmax.f32 %v348, 0.0
    %v411 = vmax.f32 %v353, 0.0
    %v412 = vmax.f32 %v358, 0.0
    %v413 = vmax.f32 %v363, 0.0
    %v414 = vmax.f32 %v368, 0.0
    %v415 = vmax.f32 %v373, 0.0
    %v416 = vmax.f32 %v378, 0.0
    %v417 = vmax.f32 %v383, 0.0
    %v418 = vmax.f32 %v388, 0.0
    %v419 = vmax.f32 %v393, 0.0
    %v420 = vmax.f32 %v398, 0.0
    %v421 = vmax.f32 %v403, 0.0
    %422 = vst [vmem:[#allocation10] sm:$0xff] %v406
    %423 = vst [vmem:[#allocation10 + $0x8] sm:$0xff] %v407
    %424 = vst [vmem:[#allocation10 + $0x10] sm:$0xff] %v408
    %425 = vst [vmem:[#allocation10 + $0x18] sm:$0xff] %v409
    %426 = vst [vmem:[#allocation10 + $0x20] sm:$0xff] %v410
    %427 = vst [vmem:[#allocation10 + $0x28] sm:$0xff] %v411
    %428 = vst [vmem:[#allocation10 + $0x30] sm:$0xff] %v412
    %429 = vst [vmem:[#allocation10 + $0x38] sm:$0xff] %v413
    %430 = vst [vmem:[#allocation10 + $0x40] sm:$0xff] %v414
    %431 = vst [vmem:[#allocation10 + $0x48] sm:$0xff] %v415
    %432 = vst [vmem:[#allocation10 + $0x50] sm:$0xff] %v416
    %433 = vst [vmem:[#allocation10 + $0x58] sm:$0xff] %v417
    %434 = vst [vmem:[#allocation10 + $0x60] sm:$0xff] %v418
    %435 = vst [vmem:[#allocation10 + $0x68] sm:$0xff] %v419
    %436 = vst [vmem:[#allocation10 + $0x70] sm:$0xff] %v420
    %437 = vst [vmem:[#allocation10 + $0x78] sm:$0xff] %v421
    // Predicated region
    $region30: #{tpu_custom_call.1} parent=1 // pred_check
      _
    $region31: #{tpu_custom_call.1} parent=1 // pred_check_branch
      %439 = sbr.rel (0) target = $region33
    $region32: #{tpu_custom_call.1} parent=1 // pred_region
      %s441 = ssub.s32 2048, 2048
      %442 = vsyncadd [#allocation6], %s441
      %s443 = sshll.u32 [#allocation10], 4
      %s444 = int_to_ptr.vmem [resolvable:$true] %s443
      %449 = dma.vmem_to_hbm [thread:$0]  %s444, 2048, %s5, [#allocation6], 128, 128, 8
    $region33: #{tpu_custom_call.1} parent=1 // pred_fallthru
      _
    // Predicated region
    $region34: #{tpu_custom_call.1} parent=1 // pred_check
      _
    $region35: #{tpu_custom_call.1} parent=1 // pred_check_branch
      %451 = sbr.rel (0) target = $region37
    $region36: #{tpu_custom_call.1} parent=1 // pred_region
      %452 = dma.done [#allocation6], 2048
    $region37: #{tpu_custom_call.1} parent=1 // pred_fallthru
      _
    %453 = vsyncpa [#allocation5], 1
    %454 = vsyncpa [#allocation8], 1
    %455 = vsyncpa [#allocation6], 1

</llo_original>
